<compile_context>
chip_gen: v6e
topology: v6e:2x2x1
jax: 0.10.0
libtpu: 0.0.40
codegen_flags: <defaults>
</compile_context>

<pallas_src>
import functools

import jax
import jax.numpy as jnp
import numpy as np
from jax.experimental import pallas as pl
from jax.experimental.pallas import tpu as pltpu

EPS = 1e-5

# 3x3 taps as (dh, dw) offsets relative to the output pixel, tap-major order
# matching the weight matrix column layout built by mat() below.
_TAPS = tuple((t // 3 - 1, t % 3 - 1) for t in range(9))


def residual_block(x, params, *, batch_tile=1, dot_dtype=jnp.bfloat16,
                   vmem_limit_bytes=56 * 1024 * 1024):
    """x: (N, C_in, H, W) float32.  Residual requires C_in == out_channels // 2.

    batch_tile: images folded into the matmul free dim per grid step.  Keep
    grid = N // batch_tile >= 2 on v7x (two TensorCores); grow it on v5e/v6e.
    dot_dtype: MXU operand dtype (bf16 default, f32 accumulation either way).
    """
    w1, b1, wg, bg, w2, b2 = params
    n, c_in, hh, ww = x.shape
    c_out = w1.shape[0]
    c_half = w2.shape[0]
    assert c_half == c_in, "residual add requires out_channels // 2 == in_channels"
    assert n % batch_tile == 0
    bt = batch_tile
    hw = hh * ww
    L = bt * hw                      # matmul free dimension per grid step
    c_max = max(c_in, c_out)

    # ---- wrapper-side layout / weight prep (plain XLA, fuses with neighbours) ----
    # single channel-major, lane-dense copy of x feeds BOTH the convs and the residual
    x_cf = jnp.transpose(x.reshape(n, c_in, hw), (1, 0, 2)).reshape(c_in, n * hw)

    def mat(wgt):
        # OIHW -> (O, 9*I); columns ordered (tap, in_channel) to match fill_taps
        o_, i_ = wgt.shape[:2]
        return jnp.transpose(wgt, (0, 2, 3, 1)).reshape(o_, 9 * i_).astype(dot_dtype)

    w1g = jnp.concatenate([mat(w1), mat(wg)], axis=0)            # (2*C_out, 9*C_in)
    b1g = jnp.concatenate([b1, bg]).reshape(2 * c_out, 1).astype(jnp.float32)
    w2m = mat(w2)                                                # (C_half, 9*C_out)
    b2c = b2.reshape(c_half, 1).astype(jnp.float32)

    # 0/1 boundary masks per tap (static, built in numpy): mask[t, p] == 1 iff the
    # tap (dh, dw) of flat pixel p reads an in-bounds pixel of its own image.
    masks_np = np.ones((9, bt, hh, ww), np.float32)
    for t, (dh, dw) in enumerate(_TAPS):
        if dh < 0:
            masks_np[t, :, :-dh, :] = 0.0
        if dh > 0:
            masks_np[t, :, hh - dh:, :] = 0.0
        if dw < 0:
            masks_np[t, :, :, :-dw] = 0.0
        if dw > 0:
            masks_np[t, :, :, ww - dw:] = 0.0
    masks = jnp.asarray(masks_np.reshape(9, L))

    def kernel(x_ref, masks_ref, w1g_ref, b1g_ref, w2_ref, b2_ref, o_ref, p_ref):
        # x_ref    : (C_in, L)       lane-dense input block (conv input AND residual)
        # masks_ref: (9, L)          0/1 boundary masks per tap
        # w1g_ref  : (2*C_out, 9*C_in)   conv_1 + gates weights, im2col layout
        # b1g_ref  : (2*C_out, 1)
        # w2_ref   : (C_half, 9*C_out)
        # b2_ref   : (C_half, 1)
        # o_ref    : (C_half, L)     channel-major output block
        # p_ref    : (9*C_max, L)    SINGLE im2col scratch shared by both stages

        def fill_taps(src, c):
            # src: (c, L) f32.  Tap (dh, dw) = src shifted by dh*W+dw lanes (wrap-around
            # lands only on masked border/cross-image positions), zeroed at the border.
            for t, (dh, dw) in enumerate(_TAPS):
                shift = (-(dh * ww + dw)) % L
                tap = src if shift == 0 else pltpu.roll(src, shift, axis=1)
                if (dh, dw) != (0, 0):
                    tap = tap * masks_ref[t:t + 1, :]     # (1, L) sublane-broadcast
                p_ref[t * c:(t + 1) * c, :] = tap.astype(p_ref.dtype)

        def inorm(v):
            # per-(channel, image) InstanceNorm, single pass (sum + sum-of-squares)
            vb = v.reshape(v.shape[0] * bt, hw) if bt > 1 else v
            s = jnp.sum(vb, axis=-1, keepdims=True)
            ss = jnp.sum(vb * vb, axis=-1, keepdims=True)
            mu = s * (1.0 / hw)
            var = ss * (1.0 / hw) - mu * mu
            out = (vb - mu) * jax.lax.rsqrt(var + EPS)
            return out.reshape(v.shape) if bt > 1 else out

        xin = x_ref[...]                                   # f32, reused for residual

        # ---- stage 1: conv_1 and gates fused into ONE MXU dot over shared taps ----
        fill_taps(xin, c_in)
        s1 = jnp.dot(w1g_ref[...], p_ref[0:9 * c_in, :],
                     preferred_element_type=jnp.float32) + b1g_ref[...]
        s1 = inorm(s1)                                     # per-channel norm of concat
        glu = s1[:c_out] * jax.nn.sigmoid(s1[c_out:])      # gated linear unit

        # ---- stage 2: conv_2, reusing the SAME im2col scratch buffer ----
        fill_taps(glu, c_out)
        h2 = jnp.dot(w2_ref[...], p_ref[0:9 * c_out, :],
                     preferred_element_type=jnp.float32) + b2_ref[...]
        h2 = inorm(h2)

        # ---- residual add, lane-dense channel-major store (no transpose) ----
        o_ref[...] = xin + h2

    full = lambda r, c: pl.BlockSpec((r, c), lambda b: (0, 0))

    out_flat = pl.pallas_call(
        kernel,
        out_shape=jax.ShapeDtypeStruct((c_half, n * hw), jnp.float32),
        grid_spec=pltpu.PrefetchScalarGridSpec(
            num_scalar_prefetch=0,
            grid=(n // bt,),
            in_specs=[
                pl.BlockSpec((c_in, L), lambda b: (0, b)),
                full(9, L),
                full(2 * c_out, 9 * c_in),
                full(2 * c_out, 1),
                full(c_half, 9 * c_out),
                full(c_half, 1),
            ],
            out_specs=pl.BlockSpec((c_half, L), lambda b: (0, b)),
            scratch_shapes=[pltpu.VMEM((9 * c_max, L), dot_dtype)],
        ),
        compiler_params=pltpu.CompilerParams(
            dimension_semantics=("parallel",),
            vmem_limit_bytes=vmem_limit_bytes),
    )(x_cf, masks, w1g, b1g, w2m, b2c)

    # NCHW fix-up in the wrapper (fuses into downstream XLA ops)
    return jnp.transpose(out_flat.reshape(c_half, n, hh, ww), (1, 0, 2, 3))


def _reference(x, params):
    """Plain-JAX reference mirroring the PyTorch forward (for verification)."""
    w1, b1, wg, bg, w2, b2 = params

    def conv(v, wgt, bias):
        y = jax.lax.conv_general_dilated(
            v, wgt, window_strides=(1, 1), padding=((1, 1), (1, 1)),
            dimension_numbers=("NCHW", "OIHW", "NCHW"))
        return y + bias[None, :, None, None]

    def inorm(v):
        mu = v.mean(axis=(2, 3), keepdims=True)
        var = ((v - mu) ** 2).mean(axis=(2, 3), keepdims=True)
        return (v - mu) / jnp.sqrt(var + EPS)

    h1 = inorm(conv(x, w1, b1))
    hg = inorm(conv(x, wg, bg))
    glu = h1 * jax.nn.sigmoid(hg)
    h2 = inorm(conv(glu, w2, b2))
    return x + h2


if __name__ == "__main__":
    # small shapes: batch=2, in_channels=4, out_channels=8, spatial=16x16
    N, C_IN, C_OUT, H, W = 2, 4, 8, 16, 16
    key = jax.random.PRNGKey(0)
    ks = jax.random.split(key, 7)

    x = jax.random.normal(ks[0], (N, C_IN, H, W), dtype=jnp.float32)
    w1 = 0.1 * jax.random.normal(ks[1], (C_OUT, C_IN, 3, 3), dtype=jnp.float32)
    b1 = 0.1 * jax.random.normal(ks[2], (C_OUT,), dtype=jnp.float32)
    wg = 0.1 * jax.random.normal(ks[3], (C_OUT, C_IN, 3, 3), dtype=jnp.float32)
    bg = 0.1 * jax.random.normal(ks[4], (C_OUT,), dtype=jnp.float32)
    w2 = 0.1 * jax.random.normal(ks[5], (C_OUT // 2, C_OUT, 3, 3), dtype=jnp.float32)
    b2 = 0.1 * jax.random.normal(ks[6], (C_OUT // 2,), dtype=jnp.float32)
    params = (w1, b1, wg, bg, w2, b2)

    ref = jax.block_until_ready(_reference(x, params))

    # exact-numerics path (f32 MXU operands): tight check of the fused structure
    out_f32 = jax.block_until_ready(
        residual_block(x, params, batch_tile=1, dot_dtype=jnp.float32))
    assert out_f32.shape == (N, C_IN, H, W)
    np.testing.assert_allclose(np.asarray(out_f32), np.asarray(ref),
                               rtol=5e-4, atol=5e-4)

    # fast path (bf16 MXU operands, f32 accumulation): loosened tolerance per review
    out_bf16 = jax.block_until_ready(
        residual_block(x, params, batch_tile=1, dot_dtype=jnp.bfloat16))
    np.testing.assert_allclose(np.asarray(out_bf16), np.asarray(ref),
                               rtol=1e-1, atol=1e-1)

    print("KERNEL_OK")
</pallas_src>

<mosaic_0001>
module attributes {stable_mosaic.version = 11 : i64} {
  func.func @kernel(%arg0: i32, %arg1: memref<4x256xf32, #tpu.memory_space<vmem>>, %arg2: memref<9x256xf32, #tpu.memory_space<vmem>>, %arg3: memref<16x36xf32, #tpu.memory_space<vmem>>, %arg4: memref<16x1xf32, #tpu.memory_space<vmem>>, %arg5: memref<4x72xf32, #tpu.memory_space<vmem>>, %arg6: memref<4x1xf32, #tpu.memory_space<vmem>>, %arg7: memref<4x256xf32, #tpu.memory_space<vmem>>, %arg8: memref<72x256xf32, #tpu.memory_space<vmem>>) attributes {dimension_semantics = [#tpu.dimension_semantics<parallel>], iteration_bounds = array<i64: 2>, scalar_prefetch = 0 : i64, scratch_operands = 1 : i64, tpu.core_type = #tpu.core_type<tc>, window_params = [{transform_indices = @transform_0, window_bounds = array<i64: 4, 256>}, {pipeline_mode = #tpu.pipeline_mode<synchronous>, transform_indices = @transform_1, window_bounds = array<i64: 9, 256>}, {pipeline_mode = #tpu.pipeline_mode<synchronous>, transform_indices = @transform_2, window_bounds = array<i64: 16, 36>}, {pipeline_mode = #tpu.pipeline_mode<synchronous>, transform_indices = @transform_3, window_bounds = array<i64: 16, 1>}, {pipeline_mode = #tpu.pipeline_mode<synchronous>, transform_indices = @transform_4, window_bounds = array<i64: 4, 72>}, {pipeline_mode = #tpu.pipeline_mode<synchronous>, transform_indices = @transform_5, window_bounds = array<i64: 4, 1>}, {transform_indices = @transform_6, window_bounds = array<i64: 4, 256>}]} {
    %c0 = arith.constant 0 : index
    %c0_0 = arith.constant 0 : index
    %0 = vector.load %arg1[%c0, %c0_0] : memref<4x256xf32, #tpu.memory_space<vmem>>, vector<4x256xf32>
    %c17_i32 = arith.constant 17 : i32
    %1 = tpu.dynamic_rotate %0 by %c17_i32 dim 1 : vector<4x256xf32>, i32 -> vector<4x256xf32>
    %c0_1 = arith.constant 0 : index
    %c0_2 = arith.constant 0 : index
    %2 = vector.load %arg2[%c0_1, %c0_2] : memref<9x256xf32, #tpu.memory_space<vmem>>, vector<1x256xf32>
    %3 = vector.broadcast %2 : vector<1x256xf32> to vector<4x256xf32>
    %4 = arith.mulf %1, %3 : vector<4x256xf32>
    %c0_3 = arith.constant 0 : index
    %c0_4 = arith.constant 0 : index
    %5 = vector.load %arg8[%c0_3, %c0_4] : memref<72x256xf32, #tpu.memory_space<vmem>>, vector<4x256xf32>
    tpu.vector_store %arg8[%c0_3, %c0_4], %4 {strides = array<i32>} : memref<72x256xf32, #tpu.memory_space<vmem>>, vector<4x256xf32>,
    %c16_i32 = arith.constant 16 : i32
    %6 = tpu.dynamic_rotate %0 by %c16_i32 dim 1 : vector<4x256xf32>, i32 -> vector<4x256xf32>
    %c1 = arith.constant 1 : index
    %c0_5 = arith.constant 0 : index
    %7 = vector.load %arg2[%c1, %c0_5] : memref<9x256xf32, #tpu.memory_space<vmem>>, vector<1x256xf32>
    %8 = vector.broadcast %7 : vector<1x256xf32> to vector<4x256xf32>
    %9 = arith.mulf %6, %8 : vector<4x256xf32>
    %c4 = arith.constant 4 : index
    %c0_6 = arith.constant 0 : index
    %10 = vector.load %arg8[%c4, %c0_6] : memref<72x256xf32, #tpu.memory_space<vmem>>, vector<4x256xf32>
    tpu.vector_store %arg8[%c4, %c0_6], %9 {strides = array<i32>} : memref<72x256xf32, #tpu.memory_space<vmem>>, vector<4x256xf32>,
    %c15_i32 = arith.constant 15 : i32
    %11 = tpu.dynamic_rotate %0 by %c15_i32 dim 1 : vector<4x256xf32>, i32 -> vector<4x256xf32>
    %c2 = arith.constant 2 : index
    %c0_7 = arith.constant 0 : index
    %12 = vector.load %arg2[%c2, %c0_7] : memref<9x256xf32, #tpu.memory_space<vmem>>, vector<1x256xf32>
    %13 = vector.broadcast %12 : vector<1x256xf32> to vector<4x256xf32>
    %14 = arith.mulf %11, %13 : vector<4x256xf32>
    %c8 = arith.constant 8 : index
    %c0_8 = arith.constant 0 : index
    %15 = vector.load %arg8[%c8, %c0_8] : memref<72x256xf32, #tpu.memory_space<vmem>>, vector<4x256xf32>
    tpu.vector_store %arg8[%c8, %c0_8], %14 {strides = array<i32>} : memref<72x256xf32, #tpu.memory_space<vmem>>, vector<4x256xf32>,
    %c1_i32 = arith.constant 1 : i32
    %16 = tpu.dynamic_rotate %0 by %c1_i32 dim 1 : vector<4x256xf32>, i32 -> vector<4x256xf32>
    %c3 = arith.constant 3 : index
    %c0_9 = arith.constant 0 : index
    %17 = vector.load %arg2[%c3, %c0_9] : memref<9x256xf32, #tpu.memory_space<vmem>>, vector<1x256xf32>
    %18 = vector.broadcast %17 : vector<1x256xf32> to vector<4x256xf32>
    %19 = arith.mulf %16, %18 : vector<4x256xf32>
    %c12 = arith.constant 12 : index
    %c0_10 = arith.constant 0 : index
    %20 = vector.load %arg8[%c12, %c0_10] : memref<72x256xf32, #tpu.memory_space<vmem>>, vector<4x256xf32>
    tpu.vector_store %arg8[%c12, %c0_10], %19 {strides = array<i32>} : memref<72x256xf32, #tpu.memory_space<vmem>>, vector<4x256xf32>,
    %c16 = arith.constant 16 : index
    %c0_11 = arith.constant 0 : index
    %21 = vector.load %arg8[%c16, %c0_11] : memref<72x256xf32, #tpu.memory_space<vmem>>, vector<4x256xf32>
    tpu.vector_store %arg8[%c16, %c0_11], %0 {strides = array<i32>} : memref<72x256xf32, #tpu.memory_space<vmem>>, vector<4x256xf32>,
    %c255_i32 = arith.constant 255 : i32
    %22 = tpu.dynamic_rotate %0 by %c255_i32 dim 1 : vector<4x256xf32>, i32 -> vector<4x256xf32>
    %c5 = arith.constant 5 : index
    %c0_12 = arith.constant 0 : index
    %23 = vector.load %arg2[%c5, %c0_12] : memref<9x256xf32, #tpu.memory_space<vmem>>, vector<1x256xf32>
    %24 = vector.broadcast %23 : vector<1x256xf32> to vector<4x256xf32>
    %25 = arith.mulf %22, %24 : vector<4x256xf32>
    %c20 = arith.constant 20 : index
    %c0_13 = arith.constant 0 : index
    %26 = vector.load %arg8[%c20, %c0_13] : memref<72x256xf32, #tpu.memory_space<vmem>>, vector<4x256xf32>
    tpu.vector_store %arg8[%c20, %c0_13], %25 {strides = array<i32>} : memref<72x256xf32, #tpu.memory_space<vmem>>, vector<4x256xf32>,
    %c241_i32 = arith.constant 241 : i32
    %27 = tpu.dynamic_rotate %0 by %c241_i32 dim 1 : vector<4x256xf32>, i32 -> vector<4x256xf32>
    %c6 = arith.constant 6 : index
    %c0_14 = arith.constant 0 : index
    %28 = vector.load %arg2[%c6, %c0_14] : memref<9x256xf32, #tpu.memory_space<vmem>>, vector<1x256xf32>
    %29 = vector.broadcast %28 : vector<1x256xf32> to vector<4x256xf32>
    %30 = arith.mulf %27, %29 : vector<4x256xf32>
    %c24 = arith.constant 24 : index
    %c0_15 = arith.constant 0 : index
    %31 = vector.load %arg8[%c24, %c0_15] : memref<72x256xf32, #tpu.memory_space<vmem>>, vector<4x256xf32>
    tpu.vector_store %arg8[%c24, %c0_15], %30 {strides = array<i32>} : memref<72x256xf32, #tpu.memory_space<vmem>>, vector<4x256xf32>,
    %c240_i32 = arith.constant 240 : i32
    %32 = tpu.dynamic_rotate %0 by %c240_i32 dim 1 : vector<4x256xf32>, i32 -> vector<4x256xf32>
    %c7 = arith.constant 7 : index
    %c0_16 = arith.constant 0 : index
    %33 = vector.load %arg2[%c7, %c0_16] : memref<9x256xf32, #tpu.memory_space<vmem>>, vector<1x256xf32>
    %34 = vector.broadcast %33 : vector<1x256xf32> to vector<4x256xf32>
    %35 = arith.mulf %32, %34 : vector<4x256xf32>
    %c28 = arith.constant 28 : index
    %c0_17 = arith.constant 0 : index
    %36 = vector.load %arg8[%c28, %c0_17] : memref<72x256xf32, #tpu.memory_space<vmem>>, vector<4x256xf32>
    tpu.vector_store %arg8[%c28, %c0_17], %35 {strides = array<i32>} : memref<72x256xf32, #tpu.memory_space<vmem>>, vector<4x256xf32>,
    %c239_i32 = arith.constant 239 : i32
    %37 = tpu.dynamic_rotate %0 by %c239_i32 dim 1 : vector<4x256xf32>, i32 -> vector<4x256xf32>
    %c8_18 = arith.constant 8 : index
    %c0_19 = arith.constant 0 : index
    %38 = vector.load %arg2[%c8_18, %c0_19] : memref<9x256xf32, #tpu.memory_space<vmem>>, vector<1x256xf32>
    %39 = vector.broadcast %38 : vector<1x256xf32> to vector<4x256xf32>
    %40 = arith.mulf %37, %39 : vector<4x256xf32>
    %c32 = arith.constant 32 : index
    %c0_20 = arith.constant 0 : index
    %41 = vector.load %arg8[%c32, %c0_20] : memref<72x256xf32, #tpu.memory_space<vmem>>, vector<4x256xf32>
    tpu.vector_store %arg8[%c32, %c0_20], %40 {strides = array<i32>} : memref<72x256xf32, #tpu.memory_space<vmem>>, vector<4x256xf32>,
    %c0_21 = arith.constant 0 : index
    %c0_22 = arith.constant 0 : index
    %42 = vector.load %arg3[%c0_21, %c0_22] : memref<16x36xf32, #tpu.memory_space<vmem>>, vector<16x36xf32>
    %c0_23 = arith.constant 0 : index
    %c0_24 = arith.constant 0 : index
    %43 = vector.load %arg8[%c0_23, %c0_24] : memref<72x256xf32, #tpu.memory_space<vmem>>, vector<36x256xf32>
    %cst = arith.constant dense<0.000000e+00> : vector<16x256xf32>
    %44 = tpu.matmul %42, %43, %cst {dimension_numbers = #tpu.dot_dimension_numbers<[1], [0], [0], [1], [0, 0, 1, 1], [], []>} : vector<16x36xf32>, vector<36x256xf32>, vector<16x256xf32> -> vector<16x256xf32>
    %c0_25 = arith.constant 0 : index
    %c0_26 = arith.constant 0 : index
    %45 = vector.load %arg4[%c0_25, %c0_26] : memref<16x1xf32, #tpu.memory_space<vmem>>, vector<16x1xf32>
    %46 = vector.broadcast %45 : vector<16x1xf32> to vector<16x256xf32>
    %47 = arith.addf %44, %46 : vector<16x256xf32>
    %cst_27 = arith.constant dense<0.000000e+00> : vector<16xf32>
    %48 = vector.multi_reduction <add>, %47, %cst_27 [1] : vector<16x256xf32> to vector<16xf32>
    %49 = vector.shape_cast %48 : vector<16xf32> to vector<16x1xf32>
    %50 = arith.mulf %47, %47 : vector<16x256xf32>
    %cst_28 = arith.constant dense<0.000000e+00> : vector<16xf32>
    %51 = vector.multi_reduction <add>, %50, %cst_28 [1] : vector<16x256xf32> to vector<16xf32>
    %52 = vector.shape_cast %51 : vector<16xf32> to vector<16x1xf32>
    %cst_29 = arith.constant 3.906250e-03 : f32
    %53 = vector.broadcast %cst_29 : f32 to vector<16x1xf32>
    %54 = arith.mulf %49, %53 : vector<16x1xf32>
    %cst_30 = arith.constant 3.906250e-03 : f32
    %55 = vector.broadcast %cst_30 : f32 to vector<16x1xf32>
    %56 = arith.mulf %52, %55 : vector<16x1xf32>
    %57 = arith.mulf %54, %54 : vector<16x1xf32>
    %58 = arith.subf %56, %57 : vector<16x1xf32>
    %59 = vector.broadcast %54 : vector<16x1xf32> to vector<16x256xf32>
    %60 = arith.subf %47, %59 : vector<16x256xf32>
    %cst_31 = arith.constant 9.99999974E-6 : f32
    %61 = vector.broadcast %cst_31 : f32 to vector<16x1xf32>
    %62 = arith.addf %58, %61 : vector<16x1xf32>
    %63 = math.rsqrt %62 : vector<16x1xf32>
    %64 = vector.broadcast %63 : vector<16x1xf32> to vector<16x256xf32>
    %65 = arith.mulf %60, %64 : vector<16x256xf32>
    %66 = vector.extract_strided_slice %65 {offsets = [0, 0], sizes = [8, 256], strides = [1, 1]} : vector<16x256xf32> to vector<8x256xf32>
    %67 = vector.extract_strided_slice %65 {offsets = [8, 0], sizes = [8, 256], strides = [1, 1]} : vector<16x256xf32> to vector<8x256xf32>
    %68 = arith.negf %67 : vector<8x256xf32>
    %69 = math.exp %68 : vector<8x256xf32>
    %cst_32 = arith.constant 1.000000e+00 : f32
    %70 = vector.broadcast %cst_32 : f32 to vector<8x256xf32>
    %71 = arith.addf %70, %69 : vector<8x256xf32>
    %72 = arith.divf %70, %71 : vector<8x256xf32>
    %73 = arith.mulf %66, %72 : vector<8x256xf32>
    %c17_i32_33 = arith.constant 17 : i32
    %74 = tpu.dynamic_rotate %73 by %c17_i32_33 dim 1 : vector<8x256xf32>, i32 -> vector<8x256xf32>
    %c0_34 = arith.constant 0 : index
    %c0_35 = arith.constant 0 : index
    %75 = vector.load %arg2[%c0_34, %c0_35] : memref<9x256xf32, #tpu.memory_space<vmem>>, vector<1x256xf32>
    %76 = vector.broadcast %75 : vector<1x256xf32> to vector<8x256xf32>
    %77 = arith.mulf %74, %76 : vector<8x256xf32>
    %c0_36 = arith.constant 0 : index
    %c0_37 = arith.constant 0 : index
    %78 = vector.load %arg8[%c0_36, %c0_37] : memref<72x256xf32, #tpu.memory_space<vmem>>, vector<8x256xf32>
    tpu.vector_store %arg8[%c0_36, %c0_37], %77 {strides = array<i32>} : memref<72x256xf32, #tpu.memory_space<vmem>>, vector<8x256xf32>,
    %c16_i32_38 = arith.constant 16 : i32
    %79 = tpu.dynamic_rotate %73 by %c16_i32_38 dim 1 : vector<8x256xf32>, i32 -> vector<8x256xf32>
    %c1_39 = arith.constant 1 : index
    %c0_40 = arith.constant 0 : index
    %80 = vector.load %arg2[%c1_39, %c0_40] : memref<9x256xf32, #tpu.memory_space<vmem>>, vector<1x256xf32>
    %81 = vector.broadcast %80 : vector<1x256xf32> to vector<8x256xf32>
    %82 = arith.mulf %79, %81 : vector<8x256xf32>
    %c8_41 = arith.constant 8 : index
    %c0_42 = arith.constant 0 : index
    %83 = vector.load %arg8[%c8_41, %c0_42] : memref<72x256xf32, #tpu.memory_space<vmem>>, vector<8x256xf32>
    tpu.vector_store %arg8[%c8_41, %c0_42], %82 {strides = array<i32>} : memref<72x256xf32, #tpu.memory_space<vmem>>, vector<8x256xf32>,
    %c15_i32_43 = arith.constant 15 : i32
    %84 = tpu.dynamic_rotate %73 by %c15_i32_43 dim 1 : vector<8x256xf32>, i32 -> vector<8x256xf32>
    %c2_44 = arith.constant 2 : index
    %c0_45 = arith.constant 0 : index
    %85 = vector.load %arg2[%c2_44, %c0_45] : memref<9x256xf32, #tpu.memory_space<vmem>>, vector<1x256xf32>
    %86 = vector.broadcast %85 : vector<1x256xf32> to vector<8x256xf32>
    %87 = arith.mulf %84, %86 : vector<8x256xf32>
    %c16_46 = arith.constant 16 : index
    %c0_47 = arith.constant 0 : index
    %88 = vector.load %arg8[%c16_46, %c0_47] : memref<72x256xf32, #tpu.memory_space<vmem>>, vector<8x256xf32>
    tpu.vector_store %arg8[%c16_46, %c0_47], %87 {strides = array<i32>} : memref<72x256xf32, #tpu.memory_space<vmem>>, vector<8x256xf32>,
    %c1_i32_48 = arith.constant 1 : i32
    %89 = tpu.dynamic_rotate %73 by %c1_i32_48 dim 1 : vector<8x256xf32>, i32 -> vector<8x256xf32>
    %c3_49 = arith.constant 3 : index
    %c0_50 = arith.constant 0 : index
    %90 = vector.load %arg2[%c3_49, %c0_50] : memref<9x256xf32, #tpu.memory_space<vmem>>, vector<1x256xf32>
    %91 = vector.broadcast %90 : vector<1x256xf32> to vector<8x256xf32>
    %92 = arith.mulf %89, %91 : vector<8x256xf32>
    %c24_51 = arith.constant 24 : index
    %c0_52 = arith.constant 0 : index
    %93 = vector.load %arg8[%c24_51, %c0_52] : memref<72x256xf32, #tpu.memory_space<vmem>>, vector<8x256xf32>
    tpu.vector_store %arg8[%c24_51, %c0_52], %92 {strides = array<i32>} : memref<72x256xf32, #tpu.memory_space<vmem>>, vector<8x256xf32>,
    %c32_53 = arith.constant 32 : index
    %c0_54 = arith.constant 0 : index
    %94 = vector.load %arg8[%c32_53, %c0_54] : memref<72x256xf32, #tpu.memory_space<vmem>>, vector<8x256xf32>
    tpu.vector_store %arg8[%c32_53, %c0_54], %73 {strides = array<i32>} : memref<72x256xf32, #tpu.memory_space<vmem>>, vector<8x256xf32>,
    %c255_i32_55 = arith.constant 255 : i32
    %95 = tpu.dynamic_rotate %73 by %c255_i32_55 dim 1 : vector<8x256xf32>, i32 -> vector<8x256xf32>
    %c5_56 = arith.constant 5 : index
    %c0_57 = arith.constant 0 : index
    %96 = vector.load %arg2[%c5_56, %c0_57] : memref<9x256xf32, #tpu.memory_space<vmem>>, vector<1x256xf32>
    %97 = vector.broadcast %96 : vector<1x256xf32> to vector<8x256xf32>
    %98 = arith.mulf %95, %97 : vector<8x256xf32>
    %c40 = arith.constant 40 : index
    %c0_58 = arith.constant 0 : index
    %99 = vector.load %arg8[%c40, %c0_58] : memref<72x256xf32, #tpu.memory_space<vmem>>, vector<8x256xf32>
    tpu.vector_store %arg8[%c40, %c0_58], %98 {strides = array<i32>} : memref<72x256xf32, #tpu.memory_space<vmem>>, vector<8x256xf32>,
    %c241_i32_59 = arith.constant 241 : i32
    %100 = tpu.dynamic_rotate %73 by %c241_i32_59 dim 1 : vector<8x256xf32>, i32 -> vector<8x256xf32>
    %c6_60 = arith.constant 6 : index
    %c0_61 = arith.constant 0 : index
    %101 = vector.load %arg2[%c6_60, %c0_61] : memref<9x256xf32, #tpu.memory_space<vmem>>, vector<1x256xf32>
    %102 = vector.broadcast %101 : vector<1x256xf32> to vector<8x256xf32>
    %103 = arith.mulf %100, %102 : vector<8x256xf32>
    %c48 = arith.constant 48 : index
    %c0_62 = arith.constant 0 : index
    %104 = vector.load %arg8[%c48, %c0_62] : memref<72x256xf32, #tpu.memory_space<vmem>>, vector<8x256xf32>
    tpu.vector_store %arg8[%c48, %c0_62], %103 {strides = array<i32>} : memref<72x256xf32, #tpu.memory_space<vmem>>, vector<8x256xf32>,
    %c240_i32_63 = arith.constant 240 : i32
    %105 = tpu.dynamic_rotate %73 by %c240_i32_63 dim 1 : vector<8x256xf32>, i32 -> vector<8x256xf32>
    %c7_64 = arith.constant 7 : index
    %c0_65 = arith.constant 0 : index
    %106 = vector.load %arg2[%c7_64, %c0_65] : memref<9x256xf32, #tpu.memory_space<vmem>>, vector<1x256xf32>
    %107 = vector.broadcast %106 : vector<1x256xf32> to vector<8x256xf32>
    %108 = arith.mulf %105, %107 : vector<8x256xf32>
    %c56 = arith.constant 56 : index
    %c0_66 = arith.constant 0 : index
    %109 = vector.load %arg8[%c56, %c0_66] : memref<72x256xf32, #tpu.memory_space<vmem>>, vector<8x256xf32>
    tpu.vector_store %arg8[%c56, %c0_66], %108 {strides = array<i32>} : memref<72x256xf32, #tpu.memory_space<vmem>>, vector<8x256xf32>,
    %c239_i32_67 = arith.constant 239 : i32
    %110 = tpu.dynamic_rotate %73 by %c239_i32_67 dim 1 : vector<8x256xf32>, i32 -> vector<8x256xf32>
    %c8_68 = arith.constant 8 : index
    %c0_69 = arith.constant 0 : index
    %111 = vector.load %arg2[%c8_68, %c0_69] : memref<9x256xf32, #tpu.memory_space<vmem>>, vector<1x256xf32>
    %112 = vector.broadcast %111 : vector<1x256xf32> to vector<8x256xf32>
    %113 = arith.mulf %110, %112 : vector<8x256xf32>
    %c64 = arith.constant 64 : index
    %c0_70 = arith.constant 0 : index
    %114 = vector.load %arg8[%c64, %c0_70] : memref<72x256xf32, #tpu.memory_space<vmem>>, vector<8x256xf32>
    tpu.vector_store %arg8[%c64, %c0_70], %113 {strides = array<i32>} : memref<72x256xf32, #tpu.memory_space<vmem>>, vector<8x256xf32>,
    %c0_71 = arith.constant 0 : index
    %c0_72 = arith.constant 0 : index
    %115 = vector.load %arg5[%c0_71, %c0_72] : memref<4x72xf32, #tpu.memory_space<vmem>>, vector<4x72xf32>
    %c0_73 = arith.constant 0 : index
    %c0_74 = arith.constant 0 : index
    %116 = vector.load %arg8[%c0_73, %c0_74] : memref<72x256xf32, #tpu.memory_space<vmem>>, vector<72x256xf32>
    %cst_75 = arith.constant dense<0.000000e+00> : vector<4x256xf32>
    %117 = tpu.matmul %115, %116, %cst_75 {dimension_numbers = #tpu.dot_dimension_numbers<[1], [0], [0], [1], [0, 0, 1, 1], [], []>} : vector<4x72xf32>, vector<72x256xf32>, vector<4x256xf32> -> vector<4x256xf32>
    %c0_76 = arith.constant 0 : index
    %c0_77 = arith.constant 0 : index
    %118 = vector.load %arg6[%c0_76, %c0_77] : memref<4x1xf32, #tpu.memory_space<vmem>>, vector<4x1xf32>
    %119 = vector.broadcast %118 : vector<4x1xf32> to vector<4x256xf32>
    %120 = arith.addf %117, %119 : vector<4x256xf32>
    %cst_78 = arith.constant dense<0.000000e+00> : vector<4xf32>
    %121 = vector.multi_reduction <add>, %120, %cst_78 [1] : vector<4x256xf32> to vector<4xf32>
    %122 = vector.shape_cast %121 : vector<4xf32> to vector<4x1xf32>
    %123 = arith.mulf %120, %120 : vector<4x256xf32>
    %cst_79 = arith.constant dense<0.000000e+00> : vector<4xf32>
    %124 = vector.multi_reduction <add>, %123, %cst_79 [1] : vector<4x256xf32> to vector<4xf32>
    %125 = vector.shape_cast %124 : vector<4xf32> to vector<4x1xf32>
    %cst_80 = arith.constant 3.906250e-03 : f32
    %126 = vector.broadcast %cst_80 : f32 to vector<4x1xf32>
    %127 = arith.mulf %122, %126 : vector<4x1xf32>
    %cst_81 = arith.constant 3.906250e-03 : f32
    %128 = vector.broadcast %cst_81 : f32 to vector<4x1xf32>
    %129 = arith.mulf %125, %128 : vector<4x1xf32>
    %130 = arith.mulf %127, %127 : vector<4x1xf32>
    %131 = arith.subf %129, %130 : vector<4x1xf32>
    %132 = vector.broadcast %127 : vector<4x1xf32> to vector<4x256xf32>
    %133 = arith.subf %120, %132 : vector<4x256xf32>
    %cst_82 = arith.constant 9.99999974E-6 : f32
    %134 = vector.broadcast %cst_82 : f32 to vector<4x1xf32>
    %135 = arith.addf %131, %134 : vector<4x1xf32>
    %136 = math.rsqrt %135 : vector<4x1xf32>
    %137 = vector.broadcast %136 : vector<4x1xf32> to vector<4x256xf32>
    %138 = arith.mulf %133, %137 : vector<4x256xf32>
    %139 = arith.addf %0, %138 : vector<4x256xf32>
    %c0_83 = arith.constant 0 : index
    %c0_84 = arith.constant 0 : index
    %140 = vector.load %arg7[%c0_83, %c0_84] : memref<4x256xf32, #tpu.memory_space<vmem>>, vector<4x256xf32>
    tpu.vector_store %arg7[%c0_83, %c0_84], %139 {strides = array<i32>} : memref<4x256xf32, #tpu.memory_space<vmem>>, vector<4x256xf32>,
    return
  }
  func.func @transform_0(%arg0: i32) -> (i32, i32) {
    %c0_i32 = arith.constant 0 : i32
    %c0_i32_0 = arith.constant 0 : i32
    return %c0_i32, %arg0 : i32, i32
  }
  func.func @transform_1(%arg0: i32) -> (i32, i32) {
    %c0_i32 = arith.constant 0 : i32
    %c0_i32_0 = arith.constant 0 : i32
    %c0_i32_1 = arith.constant 0 : i32
    return %c0_i32, %c0_i32_0 : i32, i32
  }
  func.func @transform_2(%arg0: i32) -> (i32, i32) {
    %c0_i32 = arith.constant 0 : i32
    %c0_i32_0 = arith.constant 0 : i32
    %c0_i32_1 = arith.constant 0 : i32
    return %c0_i32, %c0_i32_0 : i32, i32
  }
  func.func @transform_3(%arg0: i32) -> (i32, i32) {
    %c0_i32 = arith.constant 0 : i32
    %c0_i32_0 = arith.constant 0 : i32
    %c0_i32_1 = arith.constant 0 : i32
    return %c0_i32, %c0_i32_0 : i32, i32
  }
  func.func @transform_4(%arg0: i32) -> (i32, i32) {
    %c0_i32 = arith.constant 0 : i32
    %c0_i32_0 = arith.constant 0 : i32
    %c0_i32_1 = arith.constant 0 : i32
    return %c0_i32, %c0_i32_0 : i32, i32
  }
  func.func @transform_5(%arg0: i32) -> (i32, i32) {
    %c0_i32 = arith.constant 0 : i32
    %c0_i32_0 = arith.constant 0 : i32
    %c0_i32_1 = arith.constant 0 : i32
    return %c0_i32, %c0_i32_0 : i32, i32
  }
  func.func @transform_6(%arg0: i32) -> (i32, i32) {
    %c0_i32 = arith.constant 0 : i32
    %c0_i32_0 = arith.constant 0 : i32
    return %c0_i32, %arg0 : i32, i32
  }
}

</mosaic_0001>

<llo_original>
// kernel: tpu_custom_call.1
$region0: #{tpu_custom_call.1}
  #allocation0 [shape = 'u32[]', space=smem, size = 0x4, offset = 0x4, fixed_abs, tag = 'smem constant byte address 0x4 - core index']
  #allocation1 [shape = 'u32[144,128]{1,0:T(1,128)}', space=vmem, size = 0x12000, scoped, tag = 'internal scratch']
  #allocation2 [shape = 'f32[72,256]{1,0:T(8,128)}', space=vmem, size = 0x12000, scoped, tag = 'scratch operand']
  %s0 = inlined_call_operand.vmem [shape: f32[4,512], index: 0, kind: input, shape index: {}]
  %s1 = inlined_call_operand.hbm [shape: f32[9,256], index: 1, kind: input, shape index: {}]
  %s2 = inlined_call_operand.hbm [shape: f32[16,36], index: 2, kind: input, shape index: {}]
  %s3 = inlined_call_operand.vmem [shape: f32[16,1], index: 3, kind: input, shape index: {}]
  %s4 = inlined_call_operand.vmem [shape: f32[4,72], index: 4, kind: input, shape index: {}]
  %s5 = inlined_call_operand.vmem [shape: f32[4,1], index: 5, kind: input, shape index: {}]
  %s6 = inlined_call_operand.hbm [shape: f32[4,512], index: 6, kind: output, shape index: {}]
  %s7 = sld [smem:[#allocation0]]
  $region65: #{tpu_custom_call.1} parent=0
    _
  %s9 = ssub.s32 1, %s7
  %s10 = scalar_select 0, %s9, %s7
  $region1: #{tpu_custom_call.1} parent=0
    #allocation3 [shape = 'u8[16384]{0}', space=vmem, size = 0x4000, scoped, tag = 'input window, operand 1, single buffered']
    #allocation4 [shape = 's32[2]{0}', space=sflag, size = 0x8, scoped, tag = 'scoped memory for tpu_custom_call.1']
    #allocation5 [shape = 's32[2]{0}', space=sflag, size = 0x8, scoped, tag = 'scoped memory for tpu_custom_call.1']
    #allocation6 [shape = 'u8[8192]{0}', space=vmem, size = 0x2000, scoped, tag = 'input window, operand 2, single buffered']
    #allocation7 [shape = 's32[1]{0}', space=sflag, size = 0x4, scoped, tag = 'scoped memory for tpu_custom_call.1']
    #allocation8 [shape = 'u8[8192]{0}', space=vmem, size = 0x2000, scoped, tag = 'output window, operand 0']
    %11 = vsyncpa [#allocation4], 0
    %12 = vsyncpa [#allocation7], 0
    %13 = vsyncpa [#allocation5], 0
    %s14 = scalar_lea.sflag [#allocation5], 1
    %15 = vsyncpa %s14, 0
    loop: start=0, step=1, limit=4
    $region2: #{tpu_custom_call.1} parent=1 // loop_pre_header
      _
    $region3: #{tpu_custom_call.1} parent=1 // loop_header
      %s17 = sphi 0, %s21
      %p18 = scmp.ge.s32.totalorder %s17, 4
      %s27 = sphi 0, %s29
      %s30 = sphi 0, %s27
      %s31 = sphi 0, %s30
      %s47 = sphi 0, %s31
      %s51 = sphi 0, %s51
      %s53 = sphi 0, %s51
      %s54 = sphi 0, %s53
      %s68 = sphi 0, %s54
      %s72 = sphi 0, %s72
      %s74 = sphi 0, %s72
      %s75 = sphi 0, %s74
      %s89 = sphi 0, %s75
      %s93 = sphi 0, %s93
      %s95 = sphi 0, %s93
      %s96 = sphi 0, %s95
      %s110 = sphi 0, %s96
      %s114 = sphi 0, %s114
      %s116 = sphi 0, %s114
      %s117 = sphi 0, %s116
      %s131 = sphi 0, %s117
      %s135 = sphi 0, %s135
      %s137 = sphi 0, %s135
      %s138 = sphi 0, %s137
      %s152 = sphi 0, %s138
      %s158 = sphi 0, %s160
      %s161 = sphi 0, %s158
      %s162 = sphi 0, %s161
      %s178 = sphi 0, %s162
    $region4: #{tpu_custom_call.1} parent=1 // loop_header_branch
      %20 = sbr.rel (%p18) target = $region8
    $region5: #{tpu_custom_call.1} parent=1 // loop_body
      %s22 = ssub.s32 %s17, 1
      %s23 = ssub.s32 %s17, 2
      %s24 = sadd.s32 %s17, 1
      %s25 = ssub.s32 %s17, %s24
      %p26 = scmp.eq.s32.totalorder %s25, 0
      %s28 = sadd.s32 %s27, 1
      %s29 = scalar_select %p26, %s27, %s28
      %p32 = pneg %p26
      %p33 = scmp.eq.s32.totalorder %s17, 1
      %p34 = por %p32, %p33
      %p35 = scmp.ne.s32.totalorder %s27, %s30
      %p36 = scmp.eq.s32.totalorder %s17, 0
      %p37 = por %p35, %p36
      %p38 = scmp.ne.s32.totalorder %s27, %s30
      %p39 = scmp.eq.s32.totalorder %s22, 1
      %p40 = por %p38, %p39
      %p41 = scmp.ne.s32.totalorder %s30, %s31
      %p42 = scmp.eq.s32.totalorder %s22, 0
      %p43 = por %p41, %p42
      %p44 = scmp.ne.s32.totalorder %s30, %s31
      %p45 = scmp.eq.s32.totalorder %s23, 1
      %p46 = por %p44, %p45
      %p48 = scmp.ne.s32.totalorder %s31, %s47
      %p49 = scmp.eq.s32.totalorder %s23, 0
      %p50 = por %p48, %p49
      %s52 = sadd.s32 %s51, 1
      %p55 = scmp.eq.s32.totalorder %s17, 1
      %p56 = scmp.ne.s32.totalorder %s51, %s53
      %p57 = scmp.eq.s32.totalorder %s17, 0
      %p58 = por %p56, %p57
      %p59 = scmp.ne.s32.totalorder %s51, %s53
      %p60 = scmp.eq.s32.totalorder %s22, 1
      %p61 = por %p59, %p60
      %p62 = scmp.ne.s32.totalorder %s53, %s54
      %p63 = scmp.eq.s32.totalorder %s22, 0
      %p64 = por %p62, %p63
      %p65 = scmp.ne.s32.totalorder %s53, %s54
      %p66 = scmp.eq.s32.totalorder %s23, 1
      %p67 = por %p65, %p66
      %p69 = scmp.ne.s32.totalorder %s54, %s68
      %p70 = scmp.eq.s32.totalorder %s23, 0
      %p71 = por %p69, %p70
      %s73 = sadd.s32 %s72, 1
      %p76 = scmp.eq.s32.totalorder %s17, 1
      %p77 = scmp.ne.s32.totalorder %s72, %s74
      %p78 = scmp.eq.s32.totalorder %s17, 0
      %p79 = por %p77, %p78
      %p80 = scmp.ne.s32.totalorder %s72, %s74
      %p81 = scmp.eq.s32.totalorder %s22, 1
      %p82 = por %p80, %p81
      %p83 = scmp.ne.s32.totalorder %s74, %s75
      %p84 = scmp.eq.s32.totalorder %s22, 0
      %p85 = por %p83, %p84
      %p86 = scmp.ne.s32.totalorder %s74, %s75
      %p87 = scmp.eq.s32.totalorder %s23, 1
      %p88 = por %p86, %p87
      %p90 = scmp.ne.s32.totalorder %s75, %s89
      %p91 = scmp.eq.s32.totalorder %s23, 0
      %p92 = por %p90, %p91
      %s94 = sadd.s32 %s93, 1
      %p97 = scmp.eq.s32.totalorder %s17, 1
      %p98 = scmp.ne.s32.totalorder %s93, %s95
      %p99 = scmp.eq.s32.totalorder %s17, 0
      %p100 = por %p98, %p99
      %p101 = scmp.ne.s32.totalorder %s93, %s95
      %p102 = scmp.eq.s32.totalorder %s22, 1
      %p103 = por %p101, %p102
      %p104 = scmp.ne.s32.totalorder %s95, %s96
      %p105 = scmp.eq.s32.totalorder %s22, 0
      %p106 = por %p104, %p105
      %p107 = scmp.ne.s32.totalorder %s95, %s96
      %p108 = scmp.eq.s32.totalorder %s23, 1
      %p109 = por %p107, %p108
      %p111 = scmp.ne.s32.totalorder %s96, %s110
      %p112 = scmp.eq.s32.totalorder %s23, 0
      %p113 = por %p111, %p112
      %s115 = sadd.s32 %s114, 1
      %p118 = scmp.eq.s32.totalorder %s17, 1
      %p119 = scmp.ne.s32.totalorder %s114, %s116
      %p120 = scmp.eq.s32.totalorder %s17, 0
      %p121 = por %p119, %p120
      %p122 = scmp.ne.s32.totalorder %s114, %s116
      %p123 = scmp.eq.s32.totalorder %s22, 1
      %p124 = por %p122, %p123
      %p125 = scmp.ne.s32.totalorder %s116, %s117
      %p126 = scmp.eq.s32.totalorder %s22, 0
      %p127 = por %p125, %p126
      %p128 = scmp.ne.s32.totalorder %s116, %s117
      %p129 = scmp.eq.s32.totalorder %s23, 1
      %p130 = por %p128, %p129
      %p132 = scmp.ne.s32.totalorder %s117, %s131
      %p133 = scmp.eq.s32.totalorder %s23, 0
      %p134 = por %p132, %p133
      %s136 = sadd.s32 %s135, 1
      %p139 = scmp.eq.s32.totalorder %s17, 1
      %p140 = scmp.ne.s32.totalorder %s135, %s137
      %p141 = scmp.eq.s32.totalorder %s17, 0
      %p142 = por %p140, %p141
      %p143 = scmp.ne.s32.totalorder %s135, %s137
      %p144 = scmp.eq.s32.totalorder %s22, 1
      %p145 = por %p143, %p144
      %p146 = scmp.ne.s32.totalorder %s137, %s138
      %p147 = scmp.eq.s32.totalorder %s22, 0
      %p148 = por %p146, %p147
      %p149 = scmp.ne.s32.totalorder %s137, %s138
      %p150 = scmp.eq.s32.totalorder %s23, 1
      %p151 = por %p149, %p150
      %p153 = scmp.ne.s32.totalorder %s138, %s152
      %p154 = scmp.eq.s32.totalorder %s23, 0
      %p155 = por %p153, %p154
      %s156 = ssub.s32 %s17, %s24
      %p157 = scmp.eq.s32.totalorder %s156, 0
      %s159 = sadd.s32 %s158, 1
      %s160 = scalar_select %p157, %s158, %s159
      %p163 = pneg %p157
      %p164 = scmp.eq.s32.totalorder %s17, 1
      %p165 = por %p163, %p164
      %p166 = scmp.ne.s32.totalorder %s158, %s161
      %p167 = scmp.eq.s32.totalorder %s17, 0
      %p168 = por %p166, %p167
      %p169 = scmp.ne.s32.totalorder %s158, %s161
      %p170 = scmp.eq.s32.totalorder %s22, 1
      %p171 = por %p169, %p170
      %p172 = scmp.ne.s32.totalorder %s161, %s162
      %p173 = scmp.eq.s32.totalorder %s22, 0
      %p174 = por %p172, %p173
      %p175 = scmp.ne.s32.totalorder %s161, %s162
      %p176 = scmp.eq.s32.totalorder %s23, 1
      %p177 = por %p175, %p176
      %p179 = scmp.ne.s32.totalorder %s162, %s178
      %p180 = scmp.eq.s32.totalorder %s23, 0
      %p181 = por %p179, %p180
      %p182 = scmp.le.s32.totalorder 1, %s17
      %p183 = scmp.lt.s32.totalorder %s17, 3
      %p184 = pnand %p182, %p183
      %p185 = pneg %p184
      // Predicated region
      $region9: #{tpu_custom_call.1} parent=5 // pred_check
        _
      $region10: #{tpu_custom_call.1} parent=5 // pred_check_branch
        %187 = sbr.rel (%p184) target = $region12
      $region11: #{tpu_custom_call.1} parent=5 // pred_region
        %s188 = ssub.s32 %s17, 1
        // Predicated region
        $region13: #{tpu_custom_call.1} parent=11 // pred_check
          %p189 = pneg %p64
        $region14: #{tpu_custom_call.1} parent=11 // pred_check_branch
          %191 = sbr.rel (%p189) target = $region16
        $region15: #{tpu_custom_call.1} parent=11 // pred_region
          %s193 = ssub.s32 512, 512
          %194 = vsyncadd [#allocation4], %s193
          %s195 = sshll.u32 [#allocation3], 4
          %s196 = int_to_ptr.vmem [resolvable:$true] %s195
          %201 = dma.hbm_to_vmem [thread:$0]  %s1, 512, %s196, [#allocation4], 256, 256, 16
        $region16: #{tpu_custom_call.1} parent=11 // pred_fallthru
          _
        // Predicated region
        $region17: #{tpu_custom_call.1} parent=11 // pred_check
          %p202 = pneg %p85
        $region18: #{tpu_custom_call.1} parent=11 // pred_check_branch
          %204 = sbr.rel (%p202) target = $region20
        $region19: #{tpu_custom_call.1} parent=11 // pred_region
          %s206 = ssub.s32 256, 256
          %207 = vsyncadd [#allocation7], %s206
          %s208 = sshll.u32 [#allocation6], 4
          %s209 = int_to_ptr.vmem [resolvable:$true] %s208
          %214 = dma.hbm_to_vmem [thread:$0]  %s2, 256, %s209, [#allocation7], 128, 128, 8
        $region20: #{tpu_custom_call.1} parent=11 // pred_fallthru
          _
        // Predicated region
        $region21: #{tpu_custom_call.1} parent=11 // pred_check
          %p215 = pneg %p106
        $region22: #{tpu_custom_call.1} parent=11 // pred_check_branch
          %217 = sbr.rel (%p215) target = $region24
        $region23: #{tpu_custom_call.1} parent=11 // pred_region
          _
        $region24: #{tpu_custom_call.1} parent=11 // pred_fallthru
          _
        // Predicated region
        $region25: #{tpu_custom_call.1} parent=11 // pred_check
          %p218 = pneg %p127
        $region26: #{tpu_custom_call.1} parent=11 // pred_check_branch
          %220 = sbr.rel (%p218) target = $region28
        $region27: #{tpu_custom_call.1} parent=11 // pred_region
          _
        $region28: #{tpu_custom_call.1} parent=11 // pred_fallthru
          _
        // Predicated region
        $region29: #{tpu_custom_call.1} parent=11 // pred_check
          %p221 = pneg %p148
        $region30: #{tpu_custom_call.1} parent=11 // pred_check_branch
          %223 = sbr.rel (%p221) target = $region32
        $region31: #{tpu_custom_call.1} parent=11 // pred_region
          _
        $region32: #{tpu_custom_call.1} parent=11 // pred_fallthru
          _
      $region12: #{tpu_custom_call.1} parent=5 // pred_fallthru
        _
      %p224 = scmp.lt.s32.totalorder %s17, 2
      // Predicated region
      $region33: #{tpu_custom_call.1} parent=5 // pred_check
        %p225 = pneg %p224
      $region34: #{tpu_custom_call.1} parent=5 // pred_check_branch
        %227 = sbr.rel (%p225) target = $region36
      $region35: #{tpu_custom_call.1} parent=5 // pred_region
        // Predicated region
        $region37: #{tpu_custom_call.1} parent=35 // pred_check
          %p228 = pneg %p37
        $region38: #{tpu_custom_call.1} parent=35 // pred_check_branch
          %230 = sbr.rel (%p228) target = $region40
        $region39: #{tpu_custom_call.1} parent=35 // pred_region
          %s231 = smul.u32 2, %s17
          %p232 = scmp.lt.s32.totalorder %s231, 3
          %s233 = scalar_select %p232, %s231, 3
          %s234 = smul.addr %s233, 4
          %s235 = scalar_lea.vmem %s0, %s234
          %s236 = smul.u32 2, %s17
        $region40: #{tpu_custom_call.1} parent=35 // pred_fallthru
          _
      $region36: #{tpu_custom_call.1} parent=5 // pred_fallthru
        _
      %p237 = scmp.le.s32.totalorder 1, %s17
      %p238 = scmp.lt.s32.totalorder %s17, 3
      %p239 = pnand %p237, %p238
      %p240 = pneg %p239
      // Predicated region
      $region41: #{tpu_custom_call.1} parent=5 // pred_check
        _
      $region42: #{tpu_custom_call.1} parent=5 // pred_check_branch
        %242 = sbr.rel (%p239) target = $region44
      $region43: #{tpu_custom_call.1} parent=5 // pred_region
        %s243 = ssub.s32 %s17, 1
        // Predicated region
        $region45: #{tpu_custom_call.1} parent=43 // pred_check
          %p244 = pneg %p64
        $region46: #{tpu_custom_call.1} parent=43 // pred_check_branch
          %246 = sbr.rel (%p244) target = $region48
        $region47: #{tpu_custom_call.1} parent=43 // pred_region
          %247 = dma.done [#allocation4], 512
        $region48: #{tpu_custom_call.1} parent=43 // pred_fallthru
          _
        // Predicated region
        $region49: #{tpu_custom_call.1} parent=43 // pred_check
          %p248 = pneg %p85
        $region50: #{tpu_custom_call.1} parent=43 // pred_check_branch
          %250 = sbr.rel (%p248) target = $region52
        $region51: #{tpu_custom_call.1} parent=43 // pred_region
          %251 = dma.done [#allocation7], 256
        $region52: #{tpu_custom_call.1} parent=43 // pred_fallthru
          _
        %s252 = smul.u32 2, %s22
        %p253 = scmp.lt.s32.totalorder %s252, 3
        %s254 = scalar_select %p253, %s252, 3
        %s255 = smul.addr %s254, 4
        %s256 = scalar_lea.vmem %s0, %s255
        %p257 = pneg %p43
        %p258 = pneg %p40
        %p259 = pneg %p64
        %p260 = pneg %p61
        %p261 = pneg %p85
        %p262 = pneg %p82
        %p263 = pneg %p106
        %p264 = pneg %p103
        %p265 = pneg %p127
        %p266 = pneg %p124
        %p267 = pneg %p148
        %p268 = pneg %p145
        %p269 = pneg %p174
        %p270 = pneg %p171
        %s271 = sand.u32 %s161, 1
        %s272 = scalar_lea.sflag [#allocation5], %s271
        %s273 = sand.u32 %s161, 1
        %s274 = smul.addr %s273, 8
        %s275 = scalar_lea.vmem [#allocation8], %s274
        %s276 = smul.u32 2, %s22
        %p277 = scmp.lt.s32.totalorder %s276, 3
        %s278 = scalar_select %p277, %s276, 3
        %s279 = smul.addr %s278, 4
        %s280 = scalar_lea.vmem %s0, %s279
        %s281 = smul.u32 2, %s22
        %s282 = smul.u32 2, %s22
        %v283 = vld [vmem:[%s280] sm:$0xff]
        %v285 = vcombine.high %v283, %v283
        %287 = vrot.lane.b32.xlu0 %v283, 17
        %v288 = vpop.permute.xlu0 %287
        %289 = vrot.lane.b32.xlu0 %v285, 17
        %v290 = vpop.permute.xlu0 %289
        %v291 = vlaneseq
        %v292 = vand.u32 %v291, 127
        %vm293 = vcmp.lt.s32.totalorder %v292, 17
        %v294 = vsel %vm293, %v288, %v290
        %v295 = vsel %vm293, %v290, %v288
        %v296 = vld [vmem:[#allocation3] ss:$8 sm:$0x3]
        %v298 = vlaneseq
        %v299 = vshrl.u32 %v298, 7
        %v300 = vsub.s32 0, %v299
        %v301 = vrot.slane %v296, %v300
        %v302 = vlaneseq
        %v303 = vshrl.u32 %v302, 7
        %v304 = vsub.s32 1, %v303
        %v305 = vrot.slane %v296, %v304
        %v308 = vmul.f32 %v295, %v301
        %v309 = vmul.f32 %v294, %v305
        %310 = vst [vmem:[#allocation2] sm:$0xf] %v308
        %311 = vst [vmem:[#allocation2 + $0x8] sm:$0xf] %v309
        %312 = vrot.lane.b32.xlu0 %v283, 16
        %v313 = vpop.permute.xlu0 %312
        %314 = vrot.lane.b32.xlu0 %v285, 16
        %v315 = vpop.permute.xlu0 %314
        %vm316 = vcmp.lt.s32.totalorder %v292, 16
        %v317 = vsel %vm316, %v313, %v315
        %v318 = vsel %vm316, %v315, %v313
        %s319 = scalar_lea.vmem [#allocation3], 1
        %v320 = vld [vmem:[%s319] ss:$8 sm:$0x3]
        %v322 = vlaneseq
        %v323 = vshrl.u32 %v322, 7
        %v324 = vsub.s32 0, %v323
        %v325 = vrot.slane %v320, %v324
        %v326 = vlaneseq
        %v327 = vshrl.u32 %v326, 7
        %v328 = vsub.s32 1, %v327
        %v329 = vrot.slane %v320, %v328
        %v332 = vmul.f32 %v318, %v325
        %v333 = vmul.f32 %v317, %v329
        %v336 = vrot.slane %v332, 4
        %v337 = vrot.slane %v333, 4
        %340 = vst [vmem:[#allocation2] sm:$0xf0] %v336
        %341 = vst [vmem:[#allocation2 + $0x8] sm:$0xf0] %v337
        %342 = vrot.lane.b32.xlu0 %v283, 15
        %v343 = vpop.permute.xlu0 %342
        %344 = vrot.lane.b32.xlu0 %v285, 15
        %v345 = vpop.permute.xlu0 %344
        %vm346 = vcmp.lt.s32.totalorder %v292, 15
        %v347 = vsel %vm346, %v343, %v345
        %v348 = vsel %vm346, %v345, %v343
        %s349 = scalar_lea.vmem [#allocation3], 2
        %v350 = vld [vmem:[%s349] ss:$8 sm:$0x3]
        %v352 = vlaneseq
        %v353 = vshrl.u32 %v352, 7
        %v354 = vsub.s32 0, %v353
        %v355 = vrot.slane %v350, %v354
        %v356 = vlaneseq
        %v357 = vshrl.u32 %v356, 7
        %v358 = vsub.s32 1, %v357
        %v359 = vrot.slane %v350, %v358
        %v362 = vmul.f32 %v348, %v355
        %v363 = vmul.f32 %v347, %v359
        %364 = vst [vmem:[#allocation2 + $0x10] sm:$0xf] %v362
        %365 = vst [vmem:[#allocation2 + $0x18] sm:$0xf] %v363
        %366 = vrot.lane.b32.xlu0 %v283, 1
        %v367 = vpop.permute.xlu0 %366
        %368 = vrot.lane.b32.xlu0 %v285, 1
        %v369 = vpop.permute.xlu0 %368
        %vm370 = vcmp.lt.s32.totalorder %v292, 1
        %v371 = vsel %vm370, %v367, %v369
        %v372 = vsel %vm370, %v369, %v367
        %s373 = scalar_lea.vmem [#allocation3], 3
        %v374 = vld [vmem:[%s373] ss:$8 sm:$0x3]
        %v376 = vlaneseq
        %v377 = vshrl.u32 %v376, 7
        %v378 = vsub.s32 0, %v377
        %v379 = vrot.slane %v374, %v378
        %v380 = vlaneseq
        %v381 = vshrl.u32 %v380, 7
        %v382 = vsub.s32 1, %v381
        %v383 = vrot.slane %v374, %v382
        %v386 = vmul.f32 %v372, %v379
        %v387 = vmul.f32 %v371, %v383
        %v390 = vrot.slane %v386, 4
        %v391 = vrot.slane %v387, 4
        %394 = vst [vmem:[#allocation2 + $0x10] sm:$0xf0] %v390
        %395 = vst [vmem:[#allocation2 + $0x18] sm:$0xf0] %v391
        %396 = vst [vmem:[#allocation2 + $0x20] sm:$0xf] %v283
        %397 = vst [vmem:[#allocation2 + $0x28] sm:$0xf] %v285
        %398 = vrot.lane.b32.xlu0 %v283, 127
        %v399 = vpop.permute.xlu0 %398
        %400 = vrot.lane.b32.xlu0 %v285, 127
        %v401 = vpop.permute.xlu0 %400
        %vm402 = vcmp.lt.s32.totalorder %v292, 127
        %v403 = vsel %vm402, %v399, %v401
        %v404 = vsel %vm402, %v401, %v399
        %s405 = scalar_lea.vmem [#allocation3], 5
        %v406 = vld [vmem:[%s405] ss:$8 sm:$0x3]
        %v408 = vlaneseq
        %v409 = vshrl.u32 %v408, 7
        %v410 = vsub.s32 0, %v409
        %v411 = vrot.slane %v406, %v410
        %v412 = vlaneseq
        %v413 = vshrl.u32 %v412, 7
        %v414 = vsub.s32 1, %v413
        %v415 = vrot.slane %v406, %v414
        %v418 = vmul.f32 %v403, %v411
        %v419 = vmul.f32 %v404, %v415
        %v422 = vrot.slane %v418, 4
        %v423 = vrot.slane %v419, 4
        %426 = vst [vmem:[#allocation2 + $0x20] sm:$0xf0] %v422
        %427 = vst [vmem:[#allocation2 + $0x28] sm:$0xf0] %v423
        %428 = vrot.lane.b32.xlu0 %v283, 113
        %v429 = vpop.permute.xlu0 %428
        %430 = vrot.lane.b32.xlu0 %v285, 113
        %v431 = vpop.permute.xlu0 %430
        %vm432 = vcmp.lt.s32.totalorder %v292, 113
        %v433 = vsel %vm432, %v429, %v431
        %v434 = vsel %vm432, %v431, %v429
        %s435 = scalar_lea.vmem [#allocation3], 6
        %v436 = vld [vmem:[%s435] ss:$8 sm:$0x3]
        %v438 = vlaneseq
        %v439 = vshrl.u32 %v438, 7
        %v440 = vsub.s32 0, %v439
        %v441 = vrot.slane %v436, %v440
        %v442 = vlaneseq
        %v443 = vshrl.u32 %v442, 7
        %v444 = vsub.s32 1, %v443
        %v445 = vrot.slane %v436, %v444
        %v448 = vmul.f32 %v433, %v441
        %v449 = vmul.f32 %v434, %v445
        %450 = vst [vmem:[#allocation2 + $0x30] sm:$0xf] %v448
        %451 = vst [vmem:[#allocation2 + $0x38] sm:$0xf] %v449
        %452 = vrot.lane.b32.xlu0 %v283, 112
        %v453 = vpop.permute.xlu0 %452
        %454 = vrot.lane.b32.xlu0 %v285, 112
        %v455 = vpop.permute.xlu0 %454
        %vm456 = vcmp.lt.s32.totalorder %v292, 112
        %v457 = vsel %vm456, %v453, %v455
        %v458 = vsel %vm456, %v455, %v453
        %s459 = scalar_lea.vmem [#allocation3], 7
        %v460 = vld [vmem:[%s459] ss:$8 sm:$0x3]
        %v462 = vlaneseq
        %v463 = vshrl.u32 %v462, 7
        %v464 = vsub.s32 0, %v463
        %v465 = vrot.slane %v460, %v464
        %v466 = vlaneseq
        %v467 = vshrl.u32 %v466, 7
        %v468 = vsub.s32 1, %v467
        %v469 = vrot.slane %v460, %v468
        %v472 = vmul.f32 %v457, %v465
        %v473 = vmul.f32 %v458, %v469
        %v476 = vrot.slane %v472, 4
        %v477 = vrot.slane %v473, 4
        %480 = vst [vmem:[#allocation2 + $0x30] sm:$0xf0] %v476
        %481 = vst [vmem:[#allocation2 + $0x38] sm:$0xf0] %v477
        %482 = vrot.lane.b32.xlu0 %v283, 111
        %v483 = vpop.permute.xlu0 %482
        %484 = vrot.lane.b32.xlu0 %v285, 111
        %v485 = vpop.permute.xlu0 %484
        %vm486 = vcmp.lt.s32.totalorder %v292, 111
        %v487 = vsel %vm486, %v483, %v485
        %v488 = vsel %vm486, %v485, %v483
        %s489 = scalar_lea.vmem [#allocation3], 16
        %v490 = vld [vmem:[%s489] ss:$8 sm:$0x3]
        %v492 = vlaneseq
        %v493 = vshrl.u32 %v492, 7
        %v494 = vsub.s32 0, %v493
        %v495 = vrot.slane %v490, %v494
        %v496 = vlaneseq
        %v497 = vshrl.u32 %v496, 7
        %v498 = vsub.s32 1, %v497
        %v499 = vrot.slane %v490, %v498
        %v502 = vmul.f32 %v487, %v495
        %v503 = vmul.f32 %v488, %v499
        %504 = vst [vmem:[#allocation2 + $0x40] sm:$0xf] %v502
        %505 = vst [vmem:[#allocation2 + $0x48] sm:$0xf] %v503
        %v506 = vld [vmem:[#allocation6] sm:$0xff]
        %v507 = vld [vmem:[#allocation6 + $0x8] sm:$0xff]
        %v508 = vld [vmem:[#allocation2] sm:$0xff]
        %v509 = vld [vmem:[#allocation2 + $0x8] sm:$0xff]
        %v510 = vld [vmem:[#allocation2 + $0x10] sm:$0xff]
        %v511 = vld [vmem:[#allocation2 + $0x18] sm:$0xff]
        %v512 = vld [vmem:[#allocation2 + $0x20] sm:$0xff]
        %v513 = vld [vmem:[#allocation2 + $0x28] sm:$0xff]
        %v514 = vld [vmem:[#allocation2 + $0x30] sm:$0xff]
        %v515 = vld [vmem:[#allocation2 + $0x38] sm:$0xff]
        %v516 = vld [vmem:[#allocation2 + $0x40] sm:$0xf]
        %v517 = vld [vmem:[#allocation2 + $0x48] sm:$0xf]
        %v518 = vld [vmem:[%s3] sm:$0xff]
        %v519 = vld [vmem:[%s3 + $0x8] sm:$0xff]
        %521 = vset.pattern.permute.xlu0 0
        %522 = vperm.xlu0 %521, %v518
        %v523 = vpop.permute.xlu0 %522
        %526 = vset.pattern.permute.xlu0 0
        %527 = vperm.xlu0 %526, %v519
        %v528 = vpop.permute.xlu0 %527
        %vm530 = vcmask 293888
        %v532 = vsel %vm530, %v506, 0
        %v535 = vsel %vm530, %v507, 0
        %vm537 = vcmask 1043456
        %v539 = vsel %vm537, %v516, 0
        %v542 = vsel %vm537, %v517, 0
        %544 = vmatprep.subr.mxu0 0.0
        %545 = vmatpush1.msra.mxu0 0.0
        %546 = vmatprep.subr.mxu0 0.0
        %547 = vmatpush1.msra.mxu0 0.0
        %548 = vmatprep.subr.mxu0 0.0
        %549 = vmatpush1.msra.mxu0 0.0
        %550 = vmatprep.subr.mxu0 0.0
        %551 = vmatpush1.msra.mxu0 0.0
        %552 = vmatprep.subr.mxu0 0.0
        %553 = vmatpush1.msra.mxu0 0.0
        %554 = vmatprep.subr.mxu0 0.0
        %555 = vmatpush1.msra.mxu0 0.0
        %556 = vmatprep.subr.mxu0 0.0
        %557 = vmatpush1.msra.mxu0 0.0
        %558 = vmatprep.subr.mxu0 0.0
        %559 = vmatpush1.msra.mxu0 0.0
        %560 = vmatprep.subr.mxu0 0.0
        %561 = vmatpush1.msra.mxu0 0.0
        %562 = vmatprep.subr.mxu0 0.0
        %563 = vmatpush1.msra.mxu0 0.0
        %564 = vmatprep.subr.mxu0 0.0
        %565 = vmatpush1.msra.mxu0 0.0
        %566 = vmatprep.subr.mxu0 %v542
        %567 = vmatpush1.msra.mxu0 %v539
        %568 = vmatprep.subr.mxu0 %v515
        %569 = vmatpush1.msra.mxu0 %v514
        %570 = vmatprep.subr.mxu0 %v513
        %571 = vmatpush1.msra.mxu0 %v512
        %572 = vmatprep.subr.mxu0 %v511
        %573 = vmatpush1.msra.mxu0 %v510
        %574 = vmatprep.subr.mxu0 %v509
        %575 = vmatpush1.msra.mxu0 %v508
        %576 = vmatprep.subr.mxu0 0.0
        %577 = vmatpush2.msra.mxu0 0.0
        %578 = vmatprep.subr.mxu0 0.0
        %579 = vmatpush2.msra.mxu0 0.0
        %580 = vmatprep.subr.mxu0 0.0
        %581 = vmatpush2.msra.mxu0 0.0
        %582 = vmatprep.subr.mxu0 0.0
        %583 = vmatpush2.msra.mxu0 0.0
        %584 = vmatprep.subr.mxu0 0.0
        %585 = vmatpush2.msra.mxu0 0.0
        %586 = vmatprep.subr.mxu0 0.0
        %587 = vmatpush2.msra.mxu0 0.0
        %588 = vmatprep.subr.mxu0 0.0
        %589 = vmatpush2.msra.mxu0 0.0
        %590 = vmatprep.subr.mxu0 0.0
        %591 = vmatpush2.msra.mxu0 0.0
        %592 = vmatprep.subr.mxu0 0.0
        %593 = vmatpush2.msra.mxu0 0.0
        %594 = vmatprep.subr.mxu0 0.0
        %595 = vmatpush2.msra.mxu0 0.0
        %596 = vmatprep.subr.mxu0 0.0
        %597 = vmatpush2.msra.mxu0 0.0
        %598 = vmatprep.subr.mxu0 0.0
        %599 = vmatpush2.msra.mxu0 0.0
        %600 = vmatprep.subr.mxu0 0.0
        %601 = vmatpush2.msra.mxu0 0.0
        %602 = vmatprep.subr.mxu0 0.0
        %603 = vmatpush2.msra.mxu0 0.0
        %604 = vmatprep.subr.mxu0 0.0
        %605 = vmatpush2.msra.mxu0 0.0
        %606 = vmatprep.subr.mxu0 0.0
        %607 = vmatpush2.msra.mxu0 0.0
        %608 = vmatprep.mubr.f32.mxu0 0.0
        %609 = vmatmul.mubr.f32.gmra.mxu0 %v532
        %v610 = vpop.f32.mrf.mxu0
        %v611 = vadd.f32 %v523, %v610
        %v612 = vpop.f32.mrf.mxu0
        %v613 = vadd.f32 %v523, %v612
        %614 = vmatprep.mubr.f32.mxu0 0.0
        %615 = vmatmul.mubr.f32.gmra.mxu0 %v535
        %v616 = vpop.f32.mrf.mxu0
        %v617 = vadd.f32 %v528, %v616
        %v618 = vpop.f32.mrf.mxu0
        %v619 = vadd.f32 %v528, %v618
        %620 = vdwg.mxu0
        %v621 = vadd.f32 %v611, %v613
        %622 = vadd.xlane.f32.xlu0 %v621
        %v623 = vpop.xlane.xlu0 %622
        %v624 = vadd.f32 %v617, %v619
        %625 = vadd.xlane.f32.xlu0 %v624
        %v626 = vpop.xlane.xlu0 %625
        %v627 = vmul.f32 %v611, %v611
        %v628 = vmul.f32 %v613, %v613
        %v629 = vmul.f32 %v617, %v617
        %v630 = vmul.f32 %v619, %v619
        %v631 = vadd.f32 %v627, %v628
        %632 = vadd.xlane.f32.xlu0 %v631
        %v633 = vpop.xlane.xlu0 %632
        %v634 = vadd.f32 %v629, %v630
        %635 = vadd.xlane.f32.xlu0 %v634
        %v636 = vpop.xlane.xlu0 %635
        %v637 = vmul.f32 %v623, 0.00390625
        %v638 = vmul.f32 %v626, 0.00390625
        %v639 = vmul.f32 %v633, 0.00390625
        %v640 = vmul.f32 %v636, 0.00390625
        %v641 = vmul.f32 %v637, %v637
        %v642 = vmul.f32 %v638, %v638
        %v643 = vsub.f32 %v639, %v641
        %v644 = vsub.f32 %v640, %v642
        %v645 = vsub.f32 %v611, %v637
        %v646 = vsub.f32 %v613, %v637
        %v647 = vsub.f32 %v617, %v638
        %v648 = vsub.f32 %v619, %v638
        %v649 = vadd.f32 %v643, 1e-05
        %v650 = vadd.f32 %v644, 1e-05
        %v651 = vrsqrt.pop %v649
        %v652 = vrsqrt.pop %v650
        %v653 = vmul.f32 %v645, %v651
        %v654 = vmul.f32 %v646, %v651
        %v655 = vmul.f32 %v647, %v652
        %v656 = vmul.f32 %v648, %v652
        %v657 = vxor.u32 %v655, 2147483648
        %v658 = vxor.u32 %v656, 2147483648
        %v659 = vmul.f32 %v657, 1.442695
        %v660 = vpow.pop %v659
        %v661 = vmul.f32 %v658, 1.442695
        %v662 = vpow.pop %v661
        %v663 = vadd.f32 %v660, 1.0
        %v664 = vadd.f32 %v662, 1.0
        %v665 = vrcp.pop %v663
        %v666 = vmul.f32 1.0, %v665
        %v667 = vrcp.pop %v664
        %v668 = vmul.f32 1.0, %v667
        %v669 = vmul.f32 %v653, %v666
        %v670 = vmul.f32 %v654, %v668
        %671 = vrot.lane.b32.xlu0 %v669, 17
        %v672 = vpop.permute.xlu0 %671
        %673 = vrot.lane.b32.xlu0 %v670, 17
        %v674 = vpop.permute.xlu0 %673
        %v675 = vsel %vm293, %v672, %v674
        %v676 = vsel %vm293, %v674, %v672
        %v677 = vld [vmem:[#allocation3] ss:$8 sm:$0x3]
        %v679 = vlaneseq
        %v680 = vshrl.u32 %v679, 7
        %v681 = vsub.s32 0, %v680
        %v682 = vrot.slane %v677, %v681
        %v683 = vlaneseq
        %v684 = vshrl.u32 %v683, 7
        %v685 = vsub.s32 1, %v684
        %v686 = vrot.slane %v677, %v685
        %v689 = vmul.f32 %v676, %v682
        %v690 = vmul.f32 %v675, %v686
        %691 = vst [vmem:[#allocation2] sm:$0xff] %v689
        %692 = vst [vmem:[#allocation2 + $0x8] sm:$0xff] %v690
        %693 = vrot.lane.b32.xlu0 %v669, 16
        %v694 = vpop.permute.xlu0 %693
        %695 = vrot.lane.b32.xlu0 %v670, 16
        %v696 = vpop.permute.xlu0 %695
        %v697 = vsel %vm316, %v694, %v696
        %v698 = vsel %vm316, %v696, %v694
        %v699 = vld [vmem:[%s319] ss:$8 sm:$0x3]
        %v701 = vlaneseq
        %v702 = vshrl.u32 %v701, 7
        %v703 = vsub.s32 0, %v702
        %v704 = vrot.slane %v699, %v703
        %v705 = vlaneseq
        %v706 = vshrl.u32 %v705, 7
        %v707 = vsub.s32 1, %v706
        %v708 = vrot.slane %v699, %v707
        %v711 = vmul.f32 %v698, %v704
        %v712 = vmul.f32 %v697, %v708
        %713 = vst [vmem:[#allocation2 + $0x10] sm:$0xff] %v711
        %714 = vst [vmem:[#allocation2 + $0x18] sm:$0xff] %v712
        %715 = vrot.lane.b32.xlu0 %v669, 15
        %v716 = vpop.permute.xlu0 %715
        %717 = vrot.lane.b32.xlu0 %v670, 15
        %v718 = vpop.permute.xlu0 %717
        %v719 = vsel %vm346, %v716, %v718
        %v720 = vsel %vm346, %v718, %v716
        %v721 = vld [vmem:[%s349] ss:$8 sm:$0x3]
        %v723 = vlaneseq
        %v724 = vshrl.u32 %v723, 7
        %v725 = vsub.s32 0, %v724
        %v726 = vrot.slane %v721, %v725
        %v727 = vlaneseq
        %v728 = vshrl.u32 %v727, 7
        %v729 = vsub.s32 1, %v728
        %v730 = vrot.slane %v721, %v729
        %v733 = vmul.f32 %v720, %v726
        %v734 = vmul.f32 %v719, %v730
        %735 = vst [vmem:[#allocation2 + $0x20] sm:$0xff] %v733
        %736 = vst [vmem:[#allocation2 + $0x28] sm:$0xff] %v734
        %737 = vrot.lane.b32.xlu0 %v669, 1
        %v738 = vpop.permute.xlu0 %737
        %739 = vrot.lane.b32.xlu0 %v670, 1
        %v740 = vpop.permute.xlu0 %739
        %v741 = vsel %vm370, %v738, %v740
        %v742 = vsel %vm370, %v740, %v738
        %v743 = vld [vmem:[%s373] ss:$8 sm:$0x3]
        %v745 = vlaneseq
        %v746 = vshrl.u32 %v745, 7
        %v747 = vsub.s32 0, %v746
        %v748 = vrot.slane %v743, %v747
        %v749 = vlaneseq
        %v750 = vshrl.u32 %v749, 7
        %v751 = vsub.s32 1, %v750
        %v752 = vrot.slane %v743, %v751
        %v755 = vmul.f32 %v742, %v748
        %v756 = vmul.f32 %v741, %v752
        %757 = vst [vmem:[#allocation2 + $0x30] sm:$0xff] %v755
        %758 = vst [vmem:[#allocation2 + $0x38] sm:$0xff] %v756
        %759 = vst [vmem:[#allocation2 + $0x40] sm:$0xff] %v669
        %760 = vst [vmem:[#allocation2 + $0x48] sm:$0xff] %v670
        %761 = vrot.lane.b32.xlu0 %v669, 127
        %v762 = vpop.permute.xlu0 %761
        %763 = vrot.lane.b32.xlu0 %v670, 127
        %v764 = vpop.permute.xlu0 %763
        %v765 = vsel %vm402, %v762, %v764
        %v766 = vsel %vm402, %v764, %v762
        %v767 = vld [vmem:[%s405] ss:$8 sm:$0x3]
        %v769 = vlaneseq
        %v770 = vshrl.u32 %v769, 7
        %v771 = vsub.s32 0, %v770
        %v772 = vrot.slane %v767, %v771
        %v773 = vlaneseq
        %v774 = vshrl.u32 %v773, 7
        %v775 = vsub.s32 1, %v774
        %v776 = vrot.slane %v767, %v775
        %v779 = vmul.f32 %v765, %v772
        %v780 = vmul.f32 %v766, %v776
        %781 = vst [vmem:[#allocation2 + $0x50] sm:$0xff] %v779
        %782 = vst [vmem:[#allocation2 + $0x58] sm:$0xff] %v780
        %783 = vrot.lane.b32.xlu0 %v669, 113
        %v784 = vpop.permute.xlu0 %783
        %785 = vrot.lane.b32.xlu0 %v670, 113
        %v786 = vpop.permute.xlu0 %785
        %v787 = vsel %vm432, %v784, %v786
        %v788 = vsel %vm432, %v786, %v784
        %v789 = vld [vmem:[%s435] ss:$8 sm:$0x3]
        %v791 = vlaneseq
        %v792 = vshrl.u32 %v791, 7
        %v793 = vsub.s32 0, %v792
        %v794 = vrot.slane %v789, %v793
        %v795 = vlaneseq
        %v796 = vshrl.u32 %v795, 7
        %v797 = vsub.s32 1, %v796
        %v798 = vrot.slane %v789, %v797
        %v801 = vmul.f32 %v787, %v794
        %v802 = vmul.f32 %v788, %v798
        %803 = vst [vmem:[#allocation2 + $0x60] sm:$0xff] %v801
        %804 = vst [vmem:[#allocation2 + $0x68] sm:$0xff] %v802
        %805 = vrot.lane.b32.xlu0 %v669, 112
        %v806 = vpop.permute.xlu0 %805
        %807 = vrot.lane.b32.xlu0 %v670, 112
        %v808 = vpop.permute.xlu0 %807
        %v809 = vsel %vm456, %v806, %v808
        %v810 = vsel %vm456, %v808, %v806
        %v811 = vld [vmem:[%s459] ss:$8 sm:$0x3]
        %v813 = vlaneseq
        %v814 = vshrl.u32 %v813, 7
        %v815 = vsub.s32 0, %v814
        %v816 = vrot.slane %v811, %v815
        %v817 = vlaneseq
        %v818 = vshrl.u32 %v817, 7
        %v819 = vsub.s32 1, %v818
        %v820 = vrot.slane %v811, %v819
        %v823 = vmul.f32 %v809, %v816
        %v824 = vmul.f32 %v810, %v820
        %825 = vst [vmem:[#allocation2 + $0x70] sm:$0xff] %v823
        %826 = vst [vmem:[#allocation2 + $0x78] sm:$0xff] %v824
        %827 = vrot.lane.b32.xlu0 %v669, 111
        %v828 = vpop.permute.xlu0 %827
        %829 = vrot.lane.b32.xlu0 %v670, 111
        %v830 = vpop.permute.xlu0 %829
        %v831 = vsel %vm486, %v828, %v830
        %v832 = vsel %vm486, %v830, %v828
        %v833 = vld [vmem:[%s489] ss:$8 sm:$0x3]
        %v835 = vlaneseq
        %v836 = vshrl.u32 %v835, 7
        %v837 = vsub.s32 0, %v836
        %v838 = vrot.slane %v833, %v837
        %v839 = vlaneseq
        %v840 = vshrl.u32 %v839, 7
        %v841 = vsub.s32 1, %v840
        %v842 = vrot.slane %v833, %v841
        %v845 = vmul.f32 %v831, %v838
        %v846 = vmul.f32 %v832, %v842
        %847 = vst [vmem:[#allocation2 + $0x80] sm:$0xff] %v845
        %848 = vst [vmem:[#allocation2 + $0x88] sm:$0xff] %v846
        %v849 = vld [vmem:[%s4] sm:$0xf]
        %v850 = vld [vmem:[#allocation2] sm:$0xff]
        %v851 = vld [vmem:[#allocation2 + $0x8] sm:$0xff]
        %v852 = vld [vmem:[#allocation2 + $0x10] sm:$0xff]
        %v853 = vld [vmem:[#allocation2 + $0x18] sm:$0xff]
        %v854 = vld [vmem:[#allocation2 + $0x20] sm:$0xff]
        %v855 = vld [vmem:[#allocation2 + $0x28] sm:$0xff]
        %v856 = vld [vmem:[#allocation2 + $0x30] sm:$0xff]
        %v857 = vld [vmem:[#allocation2 + $0x38] sm:$0xff]
        %v858 = vld [vmem:[#allocation2 + $0x40] sm:$0xff]
        %v859 = vld [vmem:[#allocation2 + $0x48] sm:$0xff]
        %v860 = vld [vmem:[#allocation2 + $0x50] sm:$0xff]
        %v861 = vld [vmem:[#allocation2 + $0x58] sm:$0xff]
        %v862 = vld [vmem:[#allocation2 + $0x60] sm:$0xff]
        %v863 = vld [vmem:[#allocation2 + $0x68] sm:$0xff]
        %v864 = vld [vmem:[#allocation2 + $0x70] sm:$0xff]
        %v865 = vld [vmem:[#allocation2 + $0x78] sm:$0xff]
        %v866 = vld [vmem:[#allocation2 + $0x80] sm:$0xff]
        %v867 = vld [vmem:[#allocation2 + $0x88] sm:$0xff]
        %v868 = vld [vmem:[%s5] sm:$0xf]
        %870 = vset.pattern.permute.xlu0 0
        %871 = vperm.xlu0 %870, %v868
        %v872 = vpop.permute.xlu0 %871
        %vm874 = vcmask 588800
        %v876 = vsel %vm874, %v849, 0
        %878 = vmatprep.subr.mxu0 0.0
        %879 = vmatpush1.msra.mxu0 0.0
        %880 = vmatprep.subr.mxu0 0.0
        %881 = vmatpush1.msra.mxu0 0.0
        %882 = vmatprep.subr.mxu0 0.0
        %883 = vmatpush1.msra.mxu0 0.0
        %884 = vmatprep.subr.mxu0 0.0
        %885 = vmatpush1.msra.mxu0 0.0
        %886 = vmatprep.subr.mxu0 0.0
        %887 = vmatpush1.msra.mxu0 0.0
        %888 = vmatprep.subr.mxu0 0.0
        %889 = vmatpush1.msra.mxu0 0.0
        %890 = vmatprep.subr.mxu0 0.0
        %891 = vmatpush1.msra.mxu0 0.0
        %892 = vmatprep.subr.mxu0 %v867
        %893 = vmatpush1.msra.mxu0 %v866
        %894 = vmatprep.subr.mxu0 %v865
        %895 = vmatpush1.msra.mxu0 %v864
        %896 = vmatprep.subr.mxu0 %v863
        %897 = vmatpush1.msra.mxu0 %v862
        %898 = vmatprep.subr.mxu0 %v861
        %899 = vmatpush1.msra.mxu0 %v860
        %900 = vmatprep.subr.mxu0 %v859
        %901 = vmatpush1.msra.mxu0 %v858
        %902 = vmatprep.subr.mxu0 %v857
        %903 = vmatpush1.msra.mxu0 %v856
        %904 = vmatprep.subr.mxu0 %v855
        %905 = vmatpush1.msra.mxu0 %v854
        %906 = vmatprep.subr.mxu0 %v853
        %907 = vmatpush1.msra.mxu0 %v852
        %908 = vmatprep.subr.mxu0 %v851
        %909 = vmatpush1.msra.mxu0 %v850
        %910 = vmatprep.subr.mxu0 0.0
        %911 = vmatpush2.msra.mxu0 0.0
        %912 = vmatprep.subr.mxu0 0.0
        %913 = vmatpush2.msra.mxu0 0.0
        %914 = vmatprep.subr.mxu0 0.0
        %915 = vmatpush2.msra.mxu0 0.0
        %916 = vmatprep.subr.mxu0 0.0
        %917 = vmatpush2.msra.mxu0 0.0
        %918 = vmatprep.subr.mxu0 0.0
        %919 = vmatpush2.msra.mxu0 0.0
        %920 = vmatprep.subr.mxu0 0.0
        %921 = vmatpush2.msra.mxu0 0.0
        %922 = vmatprep.subr.mxu0 0.0
        %923 = vmatpush2.msra.mxu0 0.0
        %924 = vmatprep.subr.mxu0 0.0
        %925 = vmatpush2.msra.mxu0 0.0
        %926 = vmatprep.subr.mxu0 0.0
        %927 = vmatpush2.msra.mxu0 0.0
        %928 = vmatprep.subr.mxu0 0.0
        %929 = vmatpush2.msra.mxu0 0.0
        %930 = vmatprep.subr.mxu0 0.0
        %931 = vmatpush2.msra.mxu0 0.0
        %932 = vmatprep.subr.mxu0 0.0
        %933 = vmatpush2.msra.mxu0 0.0
        %934 = vmatprep.subr.mxu0 0.0
        %935 = vmatpush2.msra.mxu0 0.0
        %936 = vmatprep.subr.mxu0 0.0
        %937 = vmatpush2.msra.mxu0 0.0
        %938 = vmatprep.subr.mxu0 0.0
        %939 = vmatpush2.msra.mxu0 0.0
        %940 = vmatprep.subr.mxu0 0.0
        %941 = vmatpush2.msra.mxu0 0.0
        %942 = vmatprep.mubr.f32.mxu0 0.0
        %943 = vmatmul.mubr.f32.gmra.mxu0 %v876
        %v944 = vpop.f32.mrf.mxu0
        %v945 = vadd.f32 %v872, %v944
        %v946 = vpop.f32.mrf.mxu0
        %v947 = vadd.f32 %v872, %v946
        %948 = vdwg.mxu0
        %v949 = vsel %vm537, %v945, 0.0
        %v950 = vsel %vm537, %v947, 0.0
        %v951 = vadd.f32 %v949, %v950
        %952 = vadd.xlane.f32.xlu0 %v951
        %v953 = vpop.xlane.xlu0 %952
        %v954 = vmul.f32 %v945, %v945
        %v955 = vmul.f32 %v947, %v947
        %v956 = vsel %vm537, %v954, 0.0
        %v957 = vsel %vm537, %v955, 0.0
        %v958 = vadd.f32 %v956, %v957
        %959 = vadd.xlane.f32.xlu0 %v958
        %v960 = vpop.xlane.xlu0 %959
        %v961 = vmul.f32 %v953, 0.00390625
        %v962 = vmul.f32 %v960, 0.00390625
        %v963 = vmul.f32 %v961, %v961
        %v964 = vsub.f32 %v962, %v963
        %v965 = vsub.f32 %v945, %v961
        %v966 = vsub.f32 %v947, %v961
        %v967 = vadd.f32 %v964, 1e-05
        %v968 = vrsqrt.pop %v967
        %v969 = vmul.f32 %v965, %v968
        %v970 = vmul.f32 %v966, %v968
        %v973 = vcombine.low %v969, %v970
        %v975 = vadd.f32 %v283, %v973
        %976 = vst [vmem:[%s275] sm:$0xff] %v975
        %s977 = sand.u32 %s161, 1
        %s978 = scalar_lea.sflag [#allocation5], %s977
        %s979 = sand.u32 %s161, 1
        %s980 = smul.addr %s979, 8
        %s981 = scalar_lea.vmem [#allocation8], %s980
        // Predicated region
        $region53: #{tpu_custom_call.1} parent=43 // pred_check
          %p982 = pneg %p171
        $region54: #{tpu_custom_call.1} parent=43 // pred_check_branch
          %984 = sbr.rel (%p982) target = $region56
        $region55: #{tpu_custom_call.1} parent=43 // pred_region
          %s985 = smul.u32 2, %s22
          %s987 = ssub.s32 128, 128
          %988 = vsyncadd %s978, %s987
          %s989 = smul.addr %s985, 64
          %s990 = scalar_lea.hbm %s6, %s989
          %s992 = sshll.u32 %s981, 4
          %s993 = int_to_ptr.vmem [resolvable:$true] %s992
          %995 = dma.vmem_to_hbm [thread:$0]  %s993, 128, %s990, %s978
        $region56: #{tpu_custom_call.1} parent=43 // pred_fallthru
          _
      $region44: #{tpu_custom_call.1} parent=5 // pred_fallthru
        _
      %p996 = scmp.le.s32.totalorder 2, %s17
      // Predicated region
      $region57: #{tpu_custom_call.1} parent=5 // pred_check
        %p997 = pneg %p996
      $region58: #{tpu_custom_call.1} parent=5 // pred_check_branch
        %999 = sbr.rel (%p997) target = $region60
      $region59: #{tpu_custom_call.1} parent=5 // pred_region
        %s1000 = ssub.s32 %s17, 2
        // Predicated region
        $region61: #{tpu_custom_call.1} parent=59 // pred_check
          %p1001 = pneg %p177
        $region62: #{tpu_custom_call.1} parent=59 // pred_check_branch
          %1003 = sbr.rel (%p1001) target = $region64
        $region63: #{tpu_custom_call.1} parent=59 // pred_region
          %s1004 = sand.u32 %s162, 1
          %s1005 = scalar_lea.sflag [#allocation5], %s1004
          %s1006 = sand.u32 %s162, 1
          %s1007 = smul.addr %s1006, 8
          %s1008 = scalar_lea.vmem [#allocation8], %s1007
          %1009 = dma.done %s1005, 128
        $region64: #{tpu_custom_call.1} parent=59 // pred_fallthru
          _
      $region60: #{tpu_custom_call.1} parent=5 // pred_fallthru
        _
    $region6: #{tpu_custom_call.1} parent=1 // loop_footer
      %s21 = sadd.s32 1, %s17
    $region7: #{tpu_custom_call.1} parent=1 // loop_footer_branch
      %16 = sbr.rel target = $region3
    $region8: #{tpu_custom_call.1} parent=1 // loop_exit
      _
    %1010 = vsyncpa [#allocation4], 1
    %s1011 = scalar_lea.sflag [#allocation4], 1
    %1012 = vsyncpa %s1011, 1
    %1013 = vsyncpa [#allocation7], 1
    %1014 = vsyncpa [#allocation5], 1
    %s1015 = scalar_lea.sflag [#allocation5], 1
    %1016 = vsyncpa %s1015, 1

</llo_original>
